<compile_context>
chip_gen: v6e
topology: v6e:2x2x1
jax: 0.10.0
libtpu: 0.0.40
codegen_flags: <defaults>
</compile_context>

<pallas_src>
import functools
import math

import jax
import jax.numpy as jnp
from jax.experimental import pallas as pl
from jax.experimental.pallas import tpu as pltpu


# ----------------------------------------------------------------------------
# Pallas kernel: one node tile (NB rows) per grid step.
# ----------------------------------------------------------------------------
def _spatial_embedding_kernel(x_ref, w_ref, b_ref, out_ref, *, d_model, num_gates):
    M, G = d_model, num_gates
    GM = G * M

    # Single fused MXU matmul (bf16 operands, f32 accumulation): every gate's Weight1 AND
    # Weight2 projection of every extras source, in one lane-dense (NB, 2*G*M) slab.
    ds = jnp.dot(x_ref[...], w_ref[...], preferred_element_type=jnp.float32) + b_ref[...]

    do = ds[:, :GM]                               # (NB, G*M) vreg-aligned slice (Weight1 path)
    ss = jnp.maximum(ds[:, GM:], 0.0)             # (NB, G*M) relu, slab-wide   (Weight2 path)

    # nonan_softmax over gates.  Subtracting any per-row constant leaves the softmax
    # unchanged, so a single full-row max (one lane reduction) replaces per-gate column
    # maxes; relu(x) >= 0 keeps the shifted exponents well inside f32 range.
    smax = jnp.max(ss, axis=-1, keepdims=True)
    ex = jnp.exp(ss - smax)                       # one EUP stream over the whole slab
    num_slab = do * ex                            # slab-wide VPU multiply

    # Gate reduction: G-1 column adds on the two slabs.
    # TODO(synk): with G a power of two and G*M == 128 this could ride the XLU as a
    #             pltpu.roll butterfly; kept as static slices for portability.
    den = ex[:, :M]
    num = num_slab[:, :M]
    for g in range(1, G):
        den = den + ex[:, g * M:(g + 1) * M]
        num = num + num_slab[:, g * M:(g + 1) * M]

    out_ref[...] = (num / den).astype(out_ref.dtype)   # exact divide (no approx reciprocal)


# ----------------------------------------------------------------------------
# One-time host-side weight folding (hoisted out of the per-call path).
# ----------------------------------------------------------------------------
def _pack_params(p):
    """Fold linears, embedding tables and all gate projections into one weight.

    Column layout of the packed weight (2*G*M lanes):
      cols [      g*M : (g+1)*M ]  = extras_g @ Weight1[g]   (g = 0..G-1)
      cols [(G+g)*M : (G+g+1)*M ]  = extras_g @ Weight2[g]   (pre-relu)
    Row layout (K+F+S rows): [eigenmaps | selected features | concat one-hot columns].
    """
    hp = jax.lax.Precision.HIGHEST
    M = p["d_model"]
    tables = p["tables"]
    K = p["W_eig"].shape[0]
    F = p["W_feat"].shape[0]
    E = len(tables)
    G = 2 + E
    sizes = [int(t.shape[0]) for t in tables]
    S = sum(sizes)
    Kin = K + F + S
    W1, W2 = p["Weight1"], p["Weight2"]

    Wall = jnp.zeros((Kin, 2 * G * M), jnp.float32)
    # gate 0: eigenmap Linear folded through Weight1[0]/Weight2[0]
    Wall = Wall.at[:K, 0:M].set(jnp.dot(p["W_eig"], W1[0], precision=hp))
    Wall = Wall.at[:K, G * M:(G + 1) * M].set(jnp.dot(p["W_eig"], W2[0], precision=hp))
    # gate 1: feature Linear
    Wall = Wall.at[K:K + F, M:2 * M].set(jnp.dot(p["W_feat"], W1[1], precision=hp))
    Wall = Wall.at[K:K + F, (G + 1) * M:(G + 2) * M].set(
        jnp.dot(p["W_feat"], W2[1], precision=hp))
    # embedding gates: fold each nn.Embedding table into its Weight1/Weight2 (exact, since
    # the one-hot matmul selects full table rows).
    off = 0
    for e in range(E):
        g = 2 + e
        r0 = K + F + off
        r1 = r0 + sizes[e]
        off += sizes[e]
        Wall = Wall.at[r0:r1, g * M:(g + 1) * M].set(
            jnp.dot(tables[e], W1[g], precision=hp))
        Wall = Wall.at[r0:r1, (G + g) * M:(G + g + 1) * M].set(
            jnp.dot(tables[e], W2[g], precision=hp))

    # Linear biases folded through the gate projections (embedding gates have no bias).
    ball = jnp.zeros((1, 2 * G * M), jnp.float32)
    ball = ball.at[0, 0:M].set(jnp.dot(p["b_eig"], W1[0], precision=hp))
    ball = ball.at[0, M:2 * M].set(jnp.dot(p["b_feat"], W1[1], precision=hp))
    ball = ball.at[0, G * M:(G + 1) * M].set(jnp.dot(p["b_eig"], W2[0], precision=hp))
    ball = ball.at[0, (G + 1) * M:(G + 2) * M].set(jnp.dot(p["b_feat"], W2[1], precision=hp))

    return {
        "Wall": Wall.astype(jnp.bfloat16),   # bf16 MXU operand; f32 accumulation in-kernel
        "ball": ball,                        # stays f32 (added post-matmul)
        "sizes": sizes, "G": G, "Kin": Kin,
    }


# ----------------------------------------------------------------------------
# Forward factory: pack once, return a jitted forward.
# ----------------------------------------------------------------------------
def make_spatial_embedding(params):
    p = params
    M = p["d_model"]
    idx_f = tuple(p["index_feature"])
    idx_e = tuple(p["index_embeddings"])
    assert len(idx_f) > 0 and len(idx_e) > 0, \
        "only the full (features + embeddings, noGC=False) configuration is kerneled"

    packed = _pack_params(p)
    Wall, ball = packed["Wall"], packed["ball"]
    sizes, G, Kin = packed["sizes"], packed["G"], packed["Kin"]
    E = len(sizes)

    kernel = functools.partial(_spatial_embedding_kernel, d_model=M, num_gates=G)

    @jax.jit
    def _forward(spatial_characteristics, eigenmaps):
        N = eigenmaps.shape[0]
        feat = spatial_characteristics[:, jnp.array(idx_f, jnp.int32)].astype(jnp.float32)
        cat = spatial_characteristics[:, jnp.array(idx_e, jnp.int32)].astype(jnp.int32)
        # TODO(synk): for large embedding tables replace the host one-hot with an in-kernel
        #             scalar-prefetched row gather instead of growing the matmul K dim.
        onehots = [jax.nn.one_hot(cat[:, e], sizes[e], dtype=jnp.float32) for e in range(E)]
        x = jnp.concatenate([eigenmaps.astype(jnp.float32), feat] + onehots, axis=-1)

        # Node-tile size: >=128 (alignment + pipelining), larger for big N to amortize
        # the ~0.35us per-grid-step overhead; N padded so there is no NB=N fallback.
        if N >= 4096:
            NB = 512
        elif N >= 1024:
            NB = 256
        else:
            NB = 128
        Np = ((N + NB - 1) // NB) * NB
        x = jnp.pad(x, ((0, Np - N), (0, 0))).astype(jnp.bfloat16)

        out = pl.pallas_call(
            kernel,
            out_shape=jax.ShapeDtypeStruct((Np, M), jnp.float32),
            grid_spec=pltpu.PrefetchScalarGridSpec(
                num_scalar_prefetch=0,
                grid=(Np // NB,),
                in_specs=[
                    pl.BlockSpec((NB, Kin), lambda i: (i, 0)),          # node tile
                    pl.BlockSpec((Kin, 2 * G * M), lambda i: (0, 0)),   # fused weights (invariant)
                    pl.BlockSpec((1, 2 * G * M), lambda i: (0, 0)),     # fused bias (invariant)
                ],
                out_specs=pl.BlockSpec((NB, M), lambda i: (i, 0)),
            ),
            compiler_params=pltpu.CompilerParams(
                dimension_semantics=("parallel",)),
        )(x, Wall, ball)
        return out[:N]

    def forward(spatial_characteristics, eigenmaps):
        if spatial_characteristics is None:
            # TODO(synk): the None branch is just the eigenmap Linear; not kerneled.
            return jnp.dot(eigenmaps, p["W_eig"],
                           precision=jax.lax.Precision.HIGHEST) + p["b_eig"]
        return _forward(spatial_characteristics, eigenmaps)

    return forward


# ----------------------------------------------------------------------------
# Deterministic parameter construction (matches the module __init__ shapes).
# ----------------------------------------------------------------------------
def init_params(key, spatial_embedding_list, eigenmaps_k, d_model):
    num_embeddings, index_embeddings, index_feature = [], [], []
    for i, v in enumerate(spatial_embedding_list):
        if v == 1:
            index_feature.append(i)
        if v > 1:
            num_embeddings.append(v)
            index_embeddings.append(i)
    E, F = len(num_embeddings), len(index_feature)
    G = E + (2 if F > 0 else 1)

    ks = jax.random.split(key, 6 + E)
    lin_s = 1.0 / math.sqrt(eigenmaps_k)
    feat_s = 1.0 / math.sqrt(max(F, 1))
    xav = math.sqrt(2.0 / (d_model + d_model))   # xavier_normal_ for (d_k=d_model, d_model)

    return {
        "d_model": d_model,
        "index_feature": index_feature,
        "index_embeddings": index_embeddings,
        # self.linear = Linear(eigenmaps_k, d_model)   (stored pre-transposed)
        "W_eig": jax.random.normal(ks[0], (eigenmaps_k, d_model), jnp.float32) * lin_s,
        "b_eig": jax.random.normal(ks[1], (d_model,), jnp.float32) * lin_s,
        # self.feature_tran = Linear(F, d_model)
        "W_feat": jax.random.normal(ks[2], (F, d_model), jnp.float32) * feat_s,
        "b_feat": jax.random.normal(ks[3], (d_model,), jnp.float32) * feat_s,
        # Gated_Dynamic_Connection(G, d_model, d_model)
        "Weight1": jax.random.normal(ks[4], (G, d_model, d_model), jnp.float32) * xav,
        "Weight2": jax.random.normal(ks[5], (G, d_model, d_model), jnp.float32) * xav,
        # nn.Embedding(num, d_model) tables
        "tables": [jax.random.normal(ks[6 + e], (num_embeddings[e], d_model), jnp.float32)
                   for e in range(E)],
    }


# ----------------------------------------------------------------------------
# Pure-JAX reference mirroring the PyTorch forward (HIGHEST-precision matmuls).
# ----------------------------------------------------------------------------
def ref_forward(spatial_characteristics, eigenmaps, p):
    hp = jax.lax.Precision.HIGHEST
    eig_emb = jnp.dot(eigenmaps, p["W_eig"], precision=hp) + p["b_eig"]
    feat = spatial_characteristics[:, jnp.array(p["index_feature"], jnp.int32)]
    feat_emb = jnp.dot(feat, p["W_feat"], precision=hp) + p["b_feat"]
    cat = spatial_characteristics[:, jnp.array(p["index_embeddings"], jnp.int32)].astype(jnp.int32)
    embs = [p["tables"][e][cat[:, e]] for e in range(len(p["tables"]))]
    extras = jnp.stack([eig_emb, feat_emb] + embs, axis=0)                     # (G, N, M)
    do = jnp.einsum("gnc,gcm->ngm", extras, p["Weight1"], precision=hp)        # (N, G, M)
    ss = jnp.maximum(jnp.einsum("gnc,gcm->ngm", extras, p["Weight2"], precision=hp), 0.0)
    w = jax.nn.softmax(ss, axis=1)                                             # nonan_softmax over gates
    return jnp.sum(do * w, axis=1)                                             # (N, M)


if __name__ == "__main__":
    key = jax.random.PRNGKey(0)
    # spatial_embedding_list: cols 0,2 categorical (5 and 7 classes), cols 1,3 continuous
    spatial_embedding_list = [5, 1, 7, 1]
    eigenmaps_k, d_model, N = 8, 32, 256

    k_p, k_e, k_f, k_c1, k_c2 = jax.random.split(key, 5)
    params = init_params(k_p, spatial_embedding_list, eigenmaps_k, d_model)

    eigenmaps = jax.random.normal(k_e, (N, eigenmaps_k), jnp.float32)
    feats = jax.random.normal(k_f, (N, 2), jnp.float32)
    cat0 = jax.random.randint(k_c1, (N,), 0, 5)
    cat1 = jax.random.randint(k_c2, (N,), 0, 7)
    sc = jnp.zeros((N, 4), jnp.float32)
    sc = sc.at[:, 0].set(cat0.astype(jnp.float32))
    sc = sc.at[:, 1].set(feats[:, 0])
    sc = sc.at[:, 2].set(cat1.astype(jnp.float32))
    sc = sc.at[:, 3].set(feats[:, 1])

    forward = make_spatial_embedding(params)
    out = jax.block_until_ready(forward(sc, eigenmaps))
    assert out.shape == (N, d_model)

    ref = jax.block_until_ready(ref_forward(sc, eigenmaps, params))
    err = float(jnp.max(jnp.abs(out - ref)))
    scale = float(jnp.max(jnp.abs(ref)))
    # bf16 MXU operands (with f32 accumulation) bound the kernel-vs-f32-reference delta to
    # ~1e-2 absolute on these O(1) outputs; the softmax itself is computed exactly in f32.
    tol = max(5e-2, 2e-2 * scale)
    assert err < tol, f"max abs diff vs reference: {err} (tolerance {tol})"

    print("KERNEL_OK")
</pallas_src>

<mosaic_0001>
module attributes {stable_mosaic.version = 11 : i64} {
  func.func @_spatial_embedding_kernel(%arg0: i32, %arg1: memref<128x22xbf16, #tpu.memory_space<vmem>>, %arg2: memref<22x256xbf16, #tpu.memory_space<vmem>>, %arg3: memref<1x256xf32, #tpu.memory_space<vmem>>, %arg4: memref<128x32xf32, #tpu.memory_space<vmem>>) attributes {dimension_semantics = [#tpu.dimension_semantics<parallel>], iteration_bounds = array<i64: 2>, scalar_prefetch = 0 : i64, scratch_operands = 0 : i64, tpu.core_type = #tpu.core_type<tc>, window_params = [{transform_indices = @transform_0, window_bounds = array<i64: 128, 22>}, {pipeline_mode = #tpu.pipeline_mode<synchronous>, transform_indices = @transform_1, window_bounds = array<i64: 22, 256>}, {pipeline_mode = #tpu.pipeline_mode<synchronous>, transform_indices = @transform_2, window_bounds = array<i64: 1, 256>}, {transform_indices = @transform_3, window_bounds = array<i64: 128, 32>}]} {
    %c0 = arith.constant 0 : index
    %c0_0 = arith.constant 0 : index
    %0 = vector.load %arg1[%c0, %c0_0] : memref<128x22xbf16, #tpu.memory_space<vmem>>, vector<128x22xbf16>
    %c0_1 = arith.constant 0 : index
    %c0_2 = arith.constant 0 : index
    %1 = vector.load %arg2[%c0_1, %c0_2] : memref<22x256xbf16, #tpu.memory_space<vmem>>, vector<22x256xbf16>
    %cst = arith.constant dense<0.000000e+00> : vector<128x256xf32>
    %2 = tpu.matmul %0, %1, %cst {dimension_numbers = #tpu.dot_dimension_numbers<[1], [0], [0], [1], [0, 0, 1, 1], [], []>} : vector<128x22xbf16>, vector<22x256xbf16>, vector<128x256xf32> -> vector<128x256xf32>
    %c0_3 = arith.constant 0 : index
    %c0_4 = arith.constant 0 : index
    %3 = vector.load %arg3[%c0_3, %c0_4] : memref<1x256xf32, #tpu.memory_space<vmem>>, vector<1x256xf32>
    %4 = vector.broadcast %3 : vector<1x256xf32> to vector<128x256xf32>
    %5 = arith.addf %2, %4 : vector<128x256xf32>
    %6 = vector.extract_strided_slice %5 {offsets = [0, 0], sizes = [128, 128], strides = [1, 1]} : vector<128x256xf32> to vector<128x128xf32>
    %7 = vector.extract_strided_slice %5 {offsets = [0, 128], sizes = [128, 128], strides = [1, 1]} : vector<128x256xf32> to vector<128x128xf32>
    %cst_5 = arith.constant 0.000000e+00 : f32
    %8 = vector.broadcast %cst_5 : f32 to vector<128x128xf32>
    %9 = arith.maximumf %7, %8 : vector<128x128xf32>
    %cst_6 = arith.constant dense<0xFF800000> : vector<128xf32>
    %10 = vector.multi_reduction <maximumf>, %9, %cst_6 [1] : vector<128x128xf32> to vector<128xf32>
    %11 = vector.shape_cast %10 : vector<128xf32> to vector<128x1xf32>
    %12 = vector.broadcast %11 : vector<128x1xf32> to vector<128x128xf32>
    %13 = arith.subf %9, %12 : vector<128x128xf32>
    %14 = math.exp %13 : vector<128x128xf32>
    %15 = arith.mulf %6, %14 : vector<128x128xf32>
    %16 = vector.extract_strided_slice %14 {offsets = [0, 0], sizes = [128, 32], strides = [1, 1]} : vector<128x128xf32> to vector<128x32xf32>
    %17 = vector.extract_strided_slice %15 {offsets = [0, 0], sizes = [128, 32], strides = [1, 1]} : vector<128x128xf32> to vector<128x32xf32>
    %18 = vector.extract_strided_slice %14 {offsets = [0, 32], sizes = [128, 32], strides = [1, 1]} : vector<128x128xf32> to vector<128x32xf32>
    %19 = arith.addf %16, %18 : vector<128x32xf32>
    %20 = vector.extract_strided_slice %15 {offsets = [0, 32], sizes = [128, 32], strides = [1, 1]} : vector<128x128xf32> to vector<128x32xf32>
    %21 = arith.addf %17, %20 : vector<128x32xf32>
    %22 = vector.extract_strided_slice %14 {offsets = [0, 64], sizes = [128, 32], strides = [1, 1]} : vector<128x128xf32> to vector<128x32xf32>
    %23 = arith.addf %19, %22 : vector<128x32xf32>
    %24 = vector.extract_strided_slice %15 {offsets = [0, 64], sizes = [128, 32], strides = [1, 1]} : vector<128x128xf32> to vector<128x32xf32>
    %25 = arith.addf %21, %24 : vector<128x32xf32>
    %26 = vector.extract_strided_slice %14 {offsets = [0, 96], sizes = [128, 32], strides = [1, 1]} : vector<128x128xf32> to vector<128x32xf32>
    %27 = arith.addf %23, %26 : vector<128x32xf32>
    %28 = vector.extract_strided_slice %15 {offsets = [0, 96], sizes = [128, 32], strides = [1, 1]} : vector<128x128xf32> to vector<128x32xf32>
    %29 = arith.addf %25, %28 : vector<128x32xf32>
    %30 = arith.divf %29, %27 : vector<128x32xf32>
    %c0_7 = arith.constant 0 : index
    %c0_8 = arith.constant 0 : index
    %31 = vector.load %arg4[%c0_7, %c0_8] : memref<128x32xf32, #tpu.memory_space<vmem>>, vector<128x32xf32>
    tpu.vector_store %arg4[%c0_7, %c0_8], %30 {strides = array<i32>} : memref<128x32xf32, #tpu.memory_space<vmem>>, vector<128x32xf32>,
    return
  }
  func.func @transform_0(%arg0: i32) -> (i32, i32) {
    %c0_i32 = arith.constant 0 : i32
    %c0_i32_0 = arith.constant 0 : i32
    return %arg0, %c0_i32 : i32, i32
  }
  func.func @transform_1(%arg0: i32) -> (i32, i32) {
    %c0_i32 = arith.constant 0 : i32
    %c0_i32_0 = arith.constant 0 : i32
    %c0_i32_1 = arith.constant 0 : i32
    return %c0_i32, %c0_i32_0 : i32, i32
  }
  func.func @transform_2(%arg0: i32) -> (i32, i32) {
    %c0_i32 = arith.constant 0 : i32
    %c0_i32_0 = arith.constant 0 : i32
    %c0_i32_1 = arith.constant 0 : i32
    return %c0_i32, %c0_i32_0 : i32, i32
  }
  func.func @transform_3(%arg0: i32) -> (i32, i32) {
    %c0_i32 = arith.constant 0 : i32
    %c0_i32_0 = arith.constant 0 : i32
    return %arg0, %c0_i32 : i32, i32
  }
}

</mosaic_0001>

<llo_original>
// kernel: _forward.1
$region0: #{_forward.1}
  #allocation0 [shape = 'u32[]', space=smem, size = 0x4, offset = 0x4, fixed_abs, tag = 'smem constant byte address 0x4 - core index']
  #allocation1 [shape = 'u32[144,128]{1,0:T(1,128)}', space=vmem, size = 0x12000, scoped, tag = 'internal scratch']
  %s0 = inlined_call_operand.vmem [shape: bf16[256,22], index: 0, kind: input, shape index: {}]
  %s1 = inlined_call_operand.vmem [shape: bf16[22,256], index: 1, kind: input, shape index: {}]
  %s2 = inlined_call_operand.vmem [shape: f32[1,256], index: 2, kind: input, shape index: {}]
  %s3 = inlined_call_operand.vmem [shape: f32[256,32], index: 3, kind: output, shape index: {}]
  %s4 = sld [smem:[#allocation0]]
  $region45: #{_forward.1} parent=0
    _
  %s6 = ssub.s32 1, %s4
  %s7 = scalar_select 0, %s6, %s4
  loop: start=0, step=1, limit=4
  $region2: #{_forward.1} parent=0 // loop_pre_header
    _
  $region3: #{_forward.1} parent=0 // loop_header
    %s9 = sphi 0, %s13
    %p10 = scmp.ge.s32.totalorder %s9, 4
    %s19 = sphi 0, %s21
    %s22 = sphi 0, %s19
    %s23 = sphi 0, %s22
    %s39 = sphi 0, %s23
    %s43 = sphi 0, %s43
    %s45 = sphi 0, %s43
    %s46 = sphi 0, %s45
    %s60 = sphi 0, %s46
    %s64 = sphi 0, %s64
    %s66 = sphi 0, %s64
    %s67 = sphi 0, %s66
    %s81 = sphi 0, %s67
    %s87 = sphi 0, %s89
    %s90 = sphi 0, %s87
    %s91 = sphi 0, %s90
    %s107 = sphi 0, %s91
  $region4: #{_forward.1} parent=0 // loop_header_branch
    %12 = sbr.rel (%p10) target = $region8
  $region5: #{_forward.1} parent=0 // loop_body
    %s14 = ssub.s32 %s9, 1
    %s15 = ssub.s32 %s9, 2
    %s16 = sadd.s32 %s9, 1
    %s17 = ssub.s32 %s9, %s16
    %p18 = scmp.eq.s32.totalorder %s17, 0
    %s20 = sadd.s32 %s19, 1
    %s21 = scalar_select %p18, %s19, %s20
    %p24 = pneg %p18
    %p25 = scmp.eq.s32.totalorder %s9, 1
    %p26 = por %p24, %p25
    %p27 = scmp.ne.s32.totalorder %s19, %s22
    %p28 = scmp.eq.s32.totalorder %s9, 0
    %p29 = por %p27, %p28
    %p30 = scmp.ne.s32.totalorder %s19, %s22
    %p31 = scmp.eq.s32.totalorder %s14, 1
    %p32 = por %p30, %p31
    %p33 = scmp.ne.s32.totalorder %s22, %s23
    %p34 = scmp.eq.s32.totalorder %s14, 0
    %p35 = por %p33, %p34
    %p36 = scmp.ne.s32.totalorder %s22, %s23
    %p37 = scmp.eq.s32.totalorder %s15, 1
    %p38 = por %p36, %p37
    %p40 = scmp.ne.s32.totalorder %s23, %s39
    %p41 = scmp.eq.s32.totalorder %s15, 0
    %p42 = por %p40, %p41
    %s44 = sadd.s32 %s43, 1
    %p47 = scmp.eq.s32.totalorder %s9, 1
    %p48 = scmp.ne.s32.totalorder %s43, %s45
    %p49 = scmp.eq.s32.totalorder %s9, 0
    %p50 = por %p48, %p49
    %p51 = scmp.ne.s32.totalorder %s43, %s45
    %p52 = scmp.eq.s32.totalorder %s14, 1
    %p53 = por %p51, %p52
    %p54 = scmp.ne.s32.totalorder %s45, %s46
    %p55 = scmp.eq.s32.totalorder %s14, 0
    %p56 = por %p54, %p55
    %p57 = scmp.ne.s32.totalorder %s45, %s46
    %p58 = scmp.eq.s32.totalorder %s15, 1
    %p59 = por %p57, %p58
    %p61 = scmp.ne.s32.totalorder %s46, %s60
    %p62 = scmp.eq.s32.totalorder %s15, 0
    %p63 = por %p61, %p62
    %s65 = sadd.s32 %s64, 1
    %p68 = scmp.eq.s32.totalorder %s9, 1
    %p69 = scmp.ne.s32.totalorder %s64, %s66
    %p70 = scmp.eq.s32.totalorder %s9, 0
    %p71 = por %p69, %p70
    %p72 = scmp.ne.s32.totalorder %s64, %s66
    %p73 = scmp.eq.s32.totalorder %s14, 1
    %p74 = por %p72, %p73
    %p75 = scmp.ne.s32.totalorder %s66, %s67
    %p76 = scmp.eq.s32.totalorder %s14, 0
    %p77 = por %p75, %p76
    %p78 = scmp.ne.s32.totalorder %s66, %s67
    %p79 = scmp.eq.s32.totalorder %s15, 1
    %p80 = por %p78, %p79
    %p82 = scmp.ne.s32.totalorder %s67, %s81
    %p83 = scmp.eq.s32.totalorder %s15, 0
    %p84 = por %p82, %p83
    %s85 = ssub.s32 %s9, %s16
    %p86 = scmp.eq.s32.totalorder %s85, 0
    %s88 = sadd.s32 %s87, 1
    %s89 = scalar_select %p86, %s87, %s88
    %p92 = pneg %p86
    %p93 = scmp.eq.s32.totalorder %s9, 1
    %p94 = por %p92, %p93
    %p95 = scmp.ne.s32.totalorder %s87, %s90
    %p96 = scmp.eq.s32.totalorder %s9, 0
    %p97 = por %p95, %p96
    %p98 = scmp.ne.s32.totalorder %s87, %s90
    %p99 = scmp.eq.s32.totalorder %s14, 1
    %p100 = por %p98, %p99
    %p101 = scmp.ne.s32.totalorder %s90, %s91
    %p102 = scmp.eq.s32.totalorder %s14, 0
    %p103 = por %p101, %p102
    %p104 = scmp.ne.s32.totalorder %s90, %s91
    %p105 = scmp.eq.s32.totalorder %s15, 1
    %p106 = por %p104, %p105
    %p108 = scmp.ne.s32.totalorder %s91, %s107
    %p109 = scmp.eq.s32.totalorder %s15, 0
    %p110 = por %p108, %p109
    %p111 = scmp.le.s32.totalorder 1, %s9
    %p112 = scmp.lt.s32.totalorder %s9, 3
    %p113 = pnand %p111, %p112
    %p114 = pneg %p113
    // Predicated region
    $region9: #{_forward.1} parent=5 // pred_check
      _
    $region10: #{_forward.1} parent=5 // pred_check_branch
      %116 = sbr.rel (%p113) target = $region12
    $region11: #{_forward.1} parent=5 // pred_region
      %s117 = ssub.s32 %s9, 1
      // Predicated region
      $region13: #{_forward.1} parent=11 // pred_check
        %p118 = pneg %p56
      $region14: #{_forward.1} parent=11 // pred_check_branch
        %120 = sbr.rel (%p118) target = $region16
      $region15: #{_forward.1} parent=11 // pred_region
        _
      $region16: #{_forward.1} parent=11 // pred_fallthru
        _
      // Predicated region
      $region17: #{_forward.1} parent=11 // pred_check
        %p121 = pneg %p77
      $region18: #{_forward.1} parent=11 // pred_check_branch
        %123 = sbr.rel (%p121) target = $region20
      $region19: #{_forward.1} parent=11 // pred_region
        _
      $region20: #{_forward.1} parent=11 // pred_fallthru
        _
    $region12: #{_forward.1} parent=5 // pred_fallthru
      _
    %p124 = scmp.lt.s32.totalorder %s9, 2
    // Predicated region
    $region21: #{_forward.1} parent=5 // pred_check
      %p125 = pneg %p124
    $region22: #{_forward.1} parent=5 // pred_check_branch
      %127 = sbr.rel (%p125) target = $region24
    $region23: #{_forward.1} parent=5 // pred_region
      // Predicated region
      $region25: #{_forward.1} parent=23 // pred_check
        %p128 = pneg %p29
      $region26: #{_forward.1} parent=23 // pred_check_branch
        %130 = sbr.rel (%p128) target = $region28
      $region27: #{_forward.1} parent=23 // pred_region
        %s131 = smul.u32 16, %s9
        %p132 = scmp.lt.s32.totalorder %s131, 31
        %s133 = scalar_select %p132, %s131, 31
        %s134 = smul.addr %s133, 4
        %s135 = scalar_lea.vmem %s0, %s134
        %s136 = smul.u32 16, %s9
      $region28: #{_forward.1} parent=23 // pred_fallthru
        _
    $region24: #{_forward.1} parent=5 // pred_fallthru
      _
    %p137 = scmp.le.s32.totalorder 1, %s9
    %p138 = scmp.lt.s32.totalorder %s9, 3
    %p139 = pnand %p137, %p138
    %p140 = pneg %p139
    // Predicated region
    $region29: #{_forward.1} parent=5 // pred_check
      _
    $region30: #{_forward.1} parent=5 // pred_check_branch
      %142 = sbr.rel (%p139) target = $region32
    $region31: #{_forward.1} parent=5 // pred_region
      %s143 = ssub.s32 %s9, 1
      %s144 = smul.u32 16, %s14
      %p145 = scmp.lt.s32.totalorder %s144, 31
      %s146 = scalar_select %p145, %s144, 31
      %s147 = smul.addr %s146, 4
      %s148 = scalar_lea.vmem %s0, %s147
      %p149 = pneg %p35
      %p150 = pneg %p32
      %p151 = pneg %p56
      %p152 = pneg %p53
      %p153 = pneg %p77
      %p154 = pneg %p74
      %p155 = pneg %p103
      %p156 = pneg %p100
      %s157 = smul.u32 16, %s14
      %p158 = scmp.lt.s32.totalorder %s157, 31
      %s159 = scalar_select %p158, %s157, 31
      %s160 = smul.addr %s159, 8
      %s161 = scalar_lea.vmem %s3, %s160
      %s162 = smul.u32 16, %s14
      %p163 = scmp.lt.s32.totalorder %s162, 31
      %s164 = scalar_select %p163, %s162, 31
      %s165 = smul.addr %s164, 4
      %s166 = scalar_lea.vmem %s0, %s165
      %s167 = smul.u32 16, %s14
      %s168 = smul.u32 16, %s14
      %p169 = scmp.lt.s32.totalorder %s168, 31
      %s170 = scalar_select %p169, %s168, 31
      %s171 = smul.addr %s170, 8
      %s172 = scalar_lea.vmem %s3, %s171
      %s173 = smul.u32 16, %s14
      %v175 = vld [vmem:[%s166] sm:$0xf]
      %v176 = vld [vmem:[%s166 + $0x4] sm:$0xf]
      %v177 = vld [vmem:[%s166 + $0x8] sm:$0xf]
      %v178 = vld [vmem:[%s166 + $0xc] sm:$0xf]
      %v179 = vld [vmem:[%s166 + $0x10] sm:$0xf]
      %v180 = vld [vmem:[%s166 + $0x14] sm:$0xf]
      %v181 = vld [vmem:[%s166 + $0x18] sm:$0xf]
      %v182 = vld [vmem:[%s166 + $0x1c] sm:$0xf]
      %v183 = vld [vmem:[%s166 + $0x20] sm:$0xf]
      %v184 = vld [vmem:[%s166 + $0x24] sm:$0xf]
      %v185 = vld [vmem:[%s166 + $0x28] sm:$0xf]
      %v186 = vld [vmem:[%s166 + $0x2c] sm:$0xf]
      %v187 = vld [vmem:[%s166 + $0x30] sm:$0xf]
      %v188 = vld [vmem:[%s166 + $0x34] sm:$0xf]
      %v189 = vld [vmem:[%s166 + $0x38] sm:$0xf]
      %v190 = vld [vmem:[%s166 + $0x3c] sm:$0xf]
      %v191 = vld [vmem:[%s1] sm:$0xff]
      %v192 = vld [vmem:[%s1 + $0x8] sm:$0xff]
      %v193 = vld [vmem:[%s1 + $0x10] sm:$0x77]
      %v194 = vld [vmem:[%s2] sm:$0x3]
      %v196 = vlaneseq
      %v197 = vshrl.u32 %v196, 7
      %v198 = vsub.s32 0, %v197
      %v199 = vrot.slane %v194, %v198
      %v200 = vlaneseq
      %v201 = vshrl.u32 %v200, 7
      %v202 = vsub.s32 1, %v201
      %v203 = vrot.slane %v194, %v202
      %v222 = vunpack.c.l.b16 %v175
      %v223 = vunpack.c.l.b16 %v176
      %v224 = vunpack.c.l.b16 %v177
      %v225 = vunpack.c.l.b16 %v178
      %v226 = vunpack.c.l.b16 %v179
      %v227 = vunpack.c.l.b16 %v180
      %v228 = vunpack.c.l.b16 %v181
      %v229 = vunpack.c.l.b16 %v182
      %v230 = vunpack.c.l.b16 %v183
      %v231 = vunpack.c.l.b16 %v184
      %v232 = vunpack.c.l.b16 %v185
      %v233 = vunpack.c.l.b16 %v186
      %v234 = vunpack.c.l.b16 %v187
      %v235 = vunpack.c.l.b16 %v188
      %v236 = vunpack.c.l.b16 %v189
      %v237 = vunpack.c.l.b16 %v190
      %v238 = vpack.c.b16 %v223, %v222
      %v239 = vpack.c.b16 %v225, %v224
      %v240 = vpack.c.b16 %v227, %v226
      %v241 = vpack.c.b16 %v229, %v228
      %v242 = vpack.c.b16 %v231, %v230
      %v243 = vpack.c.b16 %v233, %v232
      %v244 = vpack.c.b16 %v235, %v234
      %v245 = vpack.c.b16 %v237, %v236
      %v249 = vunpack.c.l.b16 %v191
      %v250 = vunpack.c.h.b16 %v191
      %v251 = vunpack.c.l.b16 %v192
      %v252 = vunpack.c.h.b16 %v192
      %v253 = vunpack.c.l.b16 %v193
      %v254 = vunpack.c.h.b16 %v193
      %v255 = vpack.c.b16 %v251, %v249
      %v256 = vpack.c.b16 %v252, %v250
      %v257 = vpack.c.b16 %v253, %v253
      %v258 = vpack.c.b16 %v254, %v254
      %vm261 = vcmask 179200
      %v263 = vsel %vm261, %v238, 0
      %v266 = vsel %vm261, %v239, 0
      %v269 = vsel %vm261, %v240, 0
      %v272 = vsel %vm261, %v241, 0
      %v275 = vsel %vm261, %v242, 0
      %v278 = vsel %vm261, %v243, 0
      %v281 = vsel %vm261, %v244, 0
      %v284 = vsel %vm261, %v245, 0
      %vm286 = vcmask 1042432
      %v288 = vsel %vm286, %v257, 0
      %v291 = vsel %vm286, %v258, 0
      %293 = vmatprep.subr.bf16.mxu0 0
      %294 = vmatpush1.bf16.msra.mxu0 0
      %295 = vmatprep.subr.bf16.mxu0 0
      %296 = vmatpush1.bf16.msra.mxu0 0
      %297 = vmatprep.subr.bf16.mxu0 0
      %298 = vmatpush1.bf16.msra.mxu0 0
      %299 = vmatprep.subr.bf16.mxu0 0
      %300 = vmatpush1.bf16.msra.mxu0 0
      %301 = vmatprep.subr.bf16.mxu0 0
      %302 = vmatpush1.bf16.msra.mxu0 0
      %303 = vmatprep.subr.bf16.mxu0 0
      %304 = vmatpush1.bf16.msra.mxu0 0
      %305 = vmatprep.subr.bf16.mxu0 %v291
      %306 = vmatpush1.bf16.msra.mxu0 %v288
      %307 = vmatprep.subr.bf16.mxu0 %v256
      %308 = vmatpush1.bf16.msra.mxu0 %v255
      %309 = vmatprep.subr.bf16.mxu0 0
      %310 = vmatpush2.bf16.msra.mxu0 0
      %311 = vmatprep.subr.bf16.mxu0 0
      %312 = vmatpush2.bf16.msra.mxu0 0
      %313 = vmatprep.subr.bf16.mxu0 0
      %314 = vmatpush2.bf16.msra.mxu0 0
      %315 = vmatprep.subr.bf16.mxu0 0
      %316 = vmatpush2.bf16.msra.mxu0 0
      %317 = vmatprep.subr.bf16.mxu0 0
      %318 = vmatpush2.bf16.msra.mxu0 0
      %319 = vmatprep.subr.bf16.mxu0 0
      %320 = vmatpush2.bf16.msra.mxu0 0
      %321 = vmatprep.subr.bf16.mxu0 0
      %322 = vmatpush2.bf16.msra.mxu0 0
      %323 = vmatprep.subr.bf16.mxu0 0
      %324 = vmatpush2.bf16.msra.mxu0 0
      %325 = vmatprep.mubr.bf16.mxu0 0
      %326 = vmatmul.mubr.bf16.gmra.mxu0 %v263
      %v327 = vpop.f32.mrf.mxu0
      %v328 = vadd.f32 %v199, %v327
      %v329 = vpop.f32.mrf.mxu0
      %v330 = vadd.f32 %v203, %v329
      %v331 = vpop.f32.mrf.mxu0
      %v332 = vadd.f32 %v199, %v331
      %v333 = vpop.f32.mrf.mxu0
      %v334 = vadd.f32 %v203, %v333
      %335 = vmatprep.mubr.bf16.mxu0 0
      %336 = vmatmul.mubr.bf16.gmra.mxu0 %v266
      %v337 = vpop.f32.mrf.mxu0
      %v338 = vadd.f32 %v199, %v337
      %v339 = vpop.f32.mrf.mxu0
      %v340 = vadd.f32 %v203, %v339
      %v341 = vpop.f32.mrf.mxu0
      %v342 = vadd.f32 %v199, %v341
      %v343 = vpop.f32.mrf.mxu0
      %v344 = vadd.f32 %v203, %v343
      %345 = vmatprep.mubr.bf16.mxu0 0
      %346 = vmatmul.mubr.bf16.gmra.mxu0 %v269
      %v347 = vpop.f32.mrf.mxu0
      %v348 = vadd.f32 %v199, %v347
      %v349 = vpop.f32.mrf.mxu0
      %v350 = vadd.f32 %v203, %v349
      %v351 = vpop.f32.mrf.mxu0
      %v352 = vadd.f32 %v199, %v351
      %v353 = vpop.f32.mrf.mxu0
      %v354 = vadd.f32 %v203, %v353
      %355 = vmatprep.mubr.bf16.mxu0 0
      %356 = vmatmul.mubr.bf16.gmra.mxu0 %v272
      %v357 = vpop.f32.mrf.mxu0
      %v358 = vadd.f32 %v199, %v357
      %v359 = vpop.f32.mrf.mxu0
      %v360 = vadd.f32 %v203, %v359
      %v361 = vpop.f32.mrf.mxu0
      %v362 = vadd.f32 %v199, %v361
      %v363 = vpop.f32.mrf.mxu0
      %v364 = vadd.f32 %v203, %v363
      %365 = vmatprep.mubr.bf16.mxu0 0
      %366 = vmatmul.mubr.bf16.gmra.mxu0 %v275
      %v367 = vpop.f32.mrf.mxu0
      %v368 = vadd.f32 %v199, %v367
      %v369 = vpop.f32.mrf.mxu0
      %v370 = vadd.f32 %v203, %v369
      %v371 = vpop.f32.mrf.mxu0
      %v372 = vadd.f32 %v199, %v371
      %v373 = vpop.f32.mrf.mxu0
      %v374 = vadd.f32 %v203, %v373
      %375 = vmatprep.mubr.bf16.mxu0 0
      %376 = vmatmul.mubr.bf16.gmra.mxu0 %v278
      %v377 = vpop.f32.mrf.mxu0
      %v378 = vadd.f32 %v199, %v377
      %v379 = vpop.f32.mrf.mxu0
      %v380 = vadd.f32 %v203, %v379
      %v381 = vpop.f32.mrf.mxu0
      %v382 = vadd.f32 %v199, %v381
      %v383 = vpop.f32.mrf.mxu0
      %v384 = vadd.f32 %v203, %v383
      %385 = vmatprep.mubr.bf16.mxu0 0
      %386 = vmatmul.mubr.bf16.gmra.mxu0 %v281
      %v387 = vpop.f32.mrf.mxu0
      %v388 = vadd.f32 %v199, %v387
      %v389 = vpop.f32.mrf.mxu0
      %v390 = vadd.f32 %v203, %v389
      %v391 = vpop.f32.mrf.mxu0
      %v392 = vadd.f32 %v199, %v391
      %v393 = vpop.f32.mrf.mxu0
      %v394 = vadd.f32 %v203, %v393
      %395 = vmatprep.mubr.bf16.mxu0 0
      %396 = vmatmul.mubr.bf16.gmra.mxu0 %v284
      %v397 = vpop.f32.mrf.mxu0
      %v398 = vadd.f32 %v199, %v397
      %v399 = vpop.f32.mrf.mxu0
      %v400 = vadd.f32 %v203, %v399
      %v401 = vpop.f32.mrf.mxu0
      %v402 = vadd.f32 %v199, %v401
      %v403 = vpop.f32.mrf.mxu0
      %v404 = vadd.f32 %v203, %v403
      %405 = vdwg.mxu0
      %v406 = vmax.f32 %v330, 0.0
      %v407 = vmax.f32 %v334, 0.0
      %v408 = vmax.f32 %v340, 0.0
      %v409 = vmax.f32 %v344, 0.0
      %v410 = vmax.f32 %v350, 0.0
      %v411 = vmax.f32 %v354, 0.0
      %v412 = vmax.f32 %v360, 0.0
      %v413 = vmax.f32 %v364, 0.0
      %v414 = vmax.f32 %v370, 0.0
      %v415 = vmax.f32 %v374, 0.0
      %v416 = vmax.f32 %v380, 0.0
      %v417 = vmax.f32 %v384, 0.0
      %v418 = vmax.f32 %v390, 0.0
      %v419 = vmax.f32 %v394, 0.0
      %v420 = vmax.f32 %v400, 0.0
      %v421 = vmax.f32 %v404, 0.0
      %422 = vmax.xlane.f32.xlu0 %v406
      %v423 = vpop.xlane.xlu0 %422
      %424 = vmax.xlane.f32.xlu0 %v407
      %v425 = vpop.xlane.xlu0 %424
      %426 = vmax.xlane.f32.xlu0 %v408
      %v427 = vpop.xlane.xlu0 %426
      %428 = vmax.xlane.f32.xlu0 %v409
      %v429 = vpop.xlane.xlu0 %428
      %430 = vmax.xlane.f32.xlu0 %v410
      %v431 = vpop.xlane.xlu0 %430
      %432 = vmax.xlane.f32.xlu0 %v411
      %v433 = vpop.xlane.xlu0 %432
      %434 = vmax.xlane.f32.xlu0 %v412
      %v435 = vpop.xlane.xlu0 %434
      %436 = vmax.xlane.f32.xlu0 %v413
      %v437 = vpop.xlane.xlu0 %436
      %438 = vmax.xlane.f32.xlu0 %v414
      %v439 = vpop.xlane.xlu0 %438
      %440 = vmax.xlane.f32.xlu0 %v415
      %v441 = vpop.xlane.xlu0 %440
      %442 = vmax.xlane.f32.xlu0 %v416
      %v443 = vpop.xlane.xlu0 %442
      %444 = vmax.xlane.f32.xlu0 %v417
      %v445 = vpop.xlane.xlu0 %444
      %446 = vmax.xlane.f32.xlu0 %v418
      %v447 = vpop.xlane.xlu0 %446
      %448 = vmax.xlane.f32.xlu0 %v419
      %v449 = vpop.xlane.xlu0 %448
      %450 = vmax.xlane.f32.xlu0 %v420
      %v451 = vpop.xlane.xlu0 %450
      %452 = vmax.xlane.f32.xlu0 %v421
      %v453 = vpop.xlane.xlu0 %452
      %v454 = vsub.f32 %v406, %v423
      %v455 = vsub.f32 %v407, %v425
      %v456 = vsub.f32 %v408, %v427
      %v457 = vsub.f32 %v409, %v429
      %v458 = vsub.f32 %v410, %v431
      %v459 = vsub.f32 %v411, %v433
      %v460 = vsub.f32 %v412, %v435
      %v461 = vsub.f32 %v413, %v437
      %v462 = vsub.f32 %v414, %v439
      %v463 = vsub.f32 %v415, %v441
      %v464 = vsub.f32 %v416, %v443
      %v465 = vsub.f32 %v417, %v445
      %v466 = vsub.f32 %v418, %v447
      %v467 = vsub.f32 %v419, %v449
      %v468 = vsub.f32 %v420, %v451
      %v469 = vsub.f32 %v421, %v453
      %v470 = vmul.f32 %v454, 1.442695
      %v471 = vpow.pop %v470
      %v472 = vmul.f32 %v455, 1.442695
      %v473 = vpow.pop %v472
      %v474 = vmul.f32 %v456, 1.442695
      %v475 = vpow.pop %v474
      %v476 = vmul.f32 %v457, 1.442695
      %v477 = vpow.pop %v476
      %v478 = vmul.f32 %v458, 1.442695
      %v479 = vpow.pop %v478
      %v480 = vmul.f32 %v459, 1.442695
      %v481 = vpow.pop %v480
      %v482 = vmul.f32 %v460, 1.442695
      %v483 = vpow.pop %v482
      %v484 = vmul.f32 %v461, 1.442695
      %v485 = vpow.pop %v484
      %v486 = vmul.f32 %v462, 1.442695
      %v487 = vpow.pop %v486
      %v488 = vmul.f32 %v463, 1.442695
      %v489 = vpow.pop %v488
      %v490 = vmul.f32 %v464, 1.442695
      %v491 = vpow.pop %v490
      %v492 = vmul.f32 %v465, 1.442695
      %v493 = vpow.pop %v492
      %v494 = vmul.f32 %v466, 1.442695
      %v495 = vpow.pop %v494
      %v496 = vmul.f32 %v467, 1.442695
      %v497 = vpow.pop %v496
      %v498 = vmul.f32 %v468, 1.442695
      %v499 = vpow.pop %v498
      %v500 = vmul.f32 %v469, 1.442695
      %v501 = vpow.pop %v500
      %v502 = vmul.f32 %v328, %v471
      %v503 = vmul.f32 %v332, %v473
      %v504 = vmul.f32 %v338, %v475
      %v505 = vmul.f32 %v342, %v477
      %v506 = vmul.f32 %v348, %v479
      %v507 = vmul.f32 %v352, %v481
      %v508 = vmul.f32 %v358, %v483
      %v509 = vmul.f32 %v362, %v485
      %v510 = vmul.f32 %v368, %v487
      %v511 = vmul.f32 %v372, %v489
      %v512 = vmul.f32 %v378, %v491
      %v513 = vmul.f32 %v382, %v493
      %v514 = vmul.f32 %v388, %v495
      %v515 = vmul.f32 %v392, %v497
      %v516 = vmul.f32 %v398, %v499
      %v517 = vmul.f32 %v402, %v501
      %534 = vrot.lane.b32.xlu0 %v471, 96
      %v535 = vpop.permute.xlu0 %534
      %536 = vrot.lane.b32.xlu0 %v473, 96
      %v537 = vpop.permute.xlu0 %536
      %538 = vrot.lane.b32.xlu0 %v475, 96
      %v539 = vpop.permute.xlu0 %538
      %540 = vrot.lane.b32.xlu0 %v477, 96
      %v541 = vpop.permute.xlu0 %540
      %542 = vrot.lane.b32.xlu0 %v479, 96
      %v543 = vpop.permute.xlu0 %542
      %544 = vrot.lane.b32.xlu0 %v481, 96
      %v545 = vpop.permute.xlu0 %544
      %546 = vrot.lane.b32.xlu0 %v483, 96
      %v547 = vpop.permute.xlu0 %546
      %548 = vrot.lane.b32.xlu0 %v485, 96
      %v549 = vpop.permute.xlu0 %548
      %550 = vrot.lane.b32.xlu0 %v487, 96
      %v551 = vpop.permute.xlu0 %550
      %552 = vrot.lane.b32.xlu0 %v489, 96
      %v553 = vpop.permute.xlu0 %552
      %554 = vrot.lane.b32.xlu0 %v491, 96
      %v555 = vpop.permute.xlu0 %554
      %556 = vrot.lane.b32.xlu0 %v493, 96
      %v557 = vpop.permute.xlu0 %556
      %558 = vrot.lane.b32.xlu0 %v495, 96
      %v559 = vpop.permute.xlu0 %558
      %560 = vrot.lane.b32.xlu0 %v497, 96
      %v561 = vpop.permute.xlu0 %560
      %562 = vrot.lane.b32.xlu0 %v499, 96
      %v563 = vpop.permute.xlu0 %562
      %564 = vrot.lane.b32.xlu0 %v501, 96
      %v565 = vpop.permute.xlu0 %564
      %v582 = vadd.f32 %v471, %v535
      %v583 = vadd.f32 %v473, %v537
      %v584 = vadd.f32 %v475, %v539
      %v585 = vadd.f32 %v477, %v541
      %v586 = vadd.f32 %v479, %v543
      %v587 = vadd.f32 %v481, %v545
      %v588 = vadd.f32 %v483, %v547
      %v589 = vadd.f32 %v485, %v549
      %v590 = vadd.f32 %v487, %v551
      %v591 = vadd.f32 %v489, %v553
      %v592 = vadd.f32 %v491, %v555
      %v593 = vadd.f32 %v493, %v557
      %v594 = vadd.f32 %v495, %v559
      %v595 = vadd.f32 %v497, %v561
      %v596 = vadd.f32 %v499, %v563
      %v597 = vadd.f32 %v501, %v565
      %614 = vrot.lane.b32.xlu0 %v502, 96
      %v615 = vpop.permute.xlu0 %614
      %616 = vrot.lane.b32.xlu0 %v503, 96
      %v617 = vpop.permute.xlu0 %616
      %618 = vrot.lane.b32.xlu0 %v504, 96
      %v619 = vpop.permute.xlu0 %618
      %620 = vrot.lane.b32.xlu0 %v505, 96
      %v621 = vpop.permute.xlu0 %620
      %622 = vrot.lane.b32.xlu0 %v506, 96
      %v623 = vpop.permute.xlu0 %622
      %624 = vrot.lane.b32.xlu0 %v507, 96
      %v625 = vpop.permute.xlu0 %624
      %626 = vrot.lane.b32.xlu0 %v508, 96
      %v627 = vpop.permute.xlu0 %626
      %628 = vrot.lane.b32.xlu0 %v509, 96
      %v629 = vpop.permute.xlu0 %628
      %630 = vrot.lane.b32.xlu0 %v510, 96
      %v631 = vpop.permute.xlu0 %630
      %632 = vrot.lane.b32.xlu0 %v511, 96
      %v633 = vpop.permute.xlu0 %632
      %634 = vrot.lane.b32.xlu0 %v512, 96
      %v635 = vpop.permute.xlu0 %634
      %636 = vrot.lane.b32.xlu0 %v513, 96
      %v637 = vpop.permute.xlu0 %636
      %638 = vrot.lane.b32.xlu0 %v514, 96
      %v639 = vpop.permute.xlu0 %638
      %640 = vrot.lane.b32.xlu0 %v515, 96
      %v641 = vpop.permute.xlu0 %640
      %642 = vrot.lane.b32.xlu0 %v516, 96
      %v643 = vpop.permute.xlu0 %642
      %644 = vrot.lane.b32.xlu0 %v517, 96
      %v645 = vpop.permute.xlu0 %644
      %v662 = vadd.f32 %v502, %v615
      %v663 = vadd.f32 %v503, %v617
      %v664 = vadd.f32 %v504, %v619
      %v665 = vadd.f32 %v505, %v621
      %v666 = vadd.f32 %v506, %v623
      %v667 = vadd.f32 %v507, %v625
      %v668 = vadd.f32 %v508, %v627
      %v669 = vadd.f32 %v509, %v629
      %v670 = vadd.f32 %v510, %v631
      %v671 = vadd.f32 %v511, %v633
      %v672 = vadd.f32 %v512, %v635
      %v673 = vadd.f32 %v513, %v637
      %v674 = vadd.f32 %v514, %v639
      %v675 = vadd.f32 %v515, %v641
      %v676 = vadd.f32 %v516, %v643
      %v677 = vadd.f32 %v517, %v645
      %678 = vrot.lane.b32.xlu0 %v471, 64
      %v679 = vpop.permute.xlu0 %678
      %680 = vrot.lane.b32.xlu0 %v473, 64
      %v681 = vpop.permute.xlu0 %680
      %682 = vrot.lane.b32.xlu0 %v475, 64
      %v683 = vpop.permute.xlu0 %682
      %684 = vrot.lane.b32.xlu0 %v477, 64
      %v685 = vpop.permute.xlu0 %684
      %686 = vrot.lane.b32.xlu0 %v479, 64
      %v687 = vpop.permute.xlu0 %686
      %688 = vrot.lane.b32.xlu0 %v481, 64
      %v689 = vpop.permute.xlu0 %688
      %690 = vrot.lane.b32.xlu0 %v483, 64
      %v691 = vpop.permute.xlu0 %690
      %692 = vrot.lane.b32.xlu0 %v485, 64
      %v693 = vpop.permute.xlu0 %692
      %694 = vrot.lane.b32.xlu0 %v487, 64
      %v695 = vpop.permute.xlu0 %694
      %696 = vrot.lane.b32.xlu0 %v489, 64
      %v697 = vpop.permute.xlu0 %696
      %698 = vrot.lane.b32.xlu0 %v491, 64
      %v699 = vpop.permute.xlu0 %698
      %700 = vrot.lane.b32.xlu0 %v493, 64
      %v701 = vpop.permute.xlu0 %700
      %702 = vrot.lane.b32.xlu0 %v495, 64
      %v703 = vpop.permute.xlu0 %702
      %704 = vrot.lane.b32.xlu0 %v497, 64
      %v705 = vpop.permute.xlu0 %704
      %706 = vrot.lane.b32.xlu0 %v499, 64
      %v707 = vpop.permute.xlu0 %706
      %708 = vrot.lane.b32.xlu0 %v501, 64
      %v709 = vpop.permute.xlu0 %708
      %v726 = vadd.f32 %v582, %v679
      %v727 = vadd.f32 %v583, %v681
      %v728 = vadd.f32 %v584, %v683
      %v729 = vadd.f32 %v585, %v685
      %v730 = vadd.f32 %v586, %v687
      %v731 = vadd.f32 %v587, %v689
      %v732 = vadd.f32 %v588, %v691
      %v733 = vadd.f32 %v589, %v693
      %v734 = vadd.f32 %v590, %v695
      %v735 = vadd.f32 %v591, %v697
      %v736 = vadd.f32 %v592, %v699
      %v737 = vadd.f32 %v593, %v701
      %v738 = vadd.f32 %v594, %v703
      %v739 = vadd.f32 %v595, %v705
      %v740 = vadd.f32 %v596, %v707
      %v741 = vadd.f32 %v597, %v709
      %742 = vrot.lane.b32.xlu0 %v502, 64
      %v743 = vpop.permute.xlu0 %742
      %744 = vrot.lane.b32.xlu0 %v503, 64
      %v745 = vpop.permute.xlu0 %744
      %746 = vrot.lane.b32.xlu0 %v504, 64
      %v747 = vpop.permute.xlu0 %746
      %748 = vrot.lane.b32.xlu0 %v505, 64
      %v749 = vpop.permute.xlu0 %748
      %750 = vrot.lane.b32.xlu0 %v506, 64
      %v751 = vpop.permute.xlu0 %750
      %752 = vrot.lane.b32.xlu0 %v507, 64
      %v753 = vpop.permute.xlu0 %752
      %754 = vrot.lane.b32.xlu0 %v508, 64
      %v755 = vpop.permute.xlu0 %754
      %756 = vrot.lane.b32.xlu0 %v509, 64
      %v757 = vpop.permute.xlu0 %756
      %758 = vrot.lane.b32.xlu0 %v510, 64
      %v759 = vpop.permute.xlu0 %758
      %760 = vrot.lane.b32.xlu0 %v511, 64
      %v761 = vpop.permute.xlu0 %760
      %762 = vrot.lane.b32.xlu0 %v512, 64
      %v763 = vpop.permute.xlu0 %762
      %764 = vrot.lane.b32.xlu0 %v513, 64
      %v765 = vpop.permute.xlu0 %764
      %766 = vrot.lane.b32.xlu0 %v514, 64
      %v767 = vpop.permute.xlu0 %766
      %768 = vrot.lane.b32.xlu0 %v515, 64
      %v769 = vpop.permute.xlu0 %768
      %770 = vrot.lane.b32.xlu0 %v516, 64
      %v771 = vpop.permute.xlu0 %770
      %772 = vrot.lane.b32.xlu0 %v517, 64
      %v773 = vpop.permute.xlu0 %772
      %v790 = vadd.f32 %v662, %v743
      %v791 = vadd.f32 %v663, %v745
      %v792 = vadd.f32 %v664, %v747
      %v793 = vadd.f32 %v665, %v749
      %v794 = vadd.f32 %v666, %v751
      %v795 = vadd.f32 %v667, %v753
      %v796 = vadd.f32 %v668, %v755
      %v797 = vadd.f32 %v669, %v757
      %v798 = vadd.f32 %v670, %v759
      %v799 = vadd.f32 %v671, %v761
      %v800 = vadd.f32 %v672, %v763
      %v801 = vadd.f32 %v673, %v765
      %v802 = vadd.f32 %v674, %v767
      %v803 = vadd.f32 %v675, %v769
      %v804 = vadd.f32 %v676, %v771
      %v805 = vadd.f32 %v677, %v773
      %806 = vrot.lane.b32.xlu0 %v471, 32
      %v807 = vpop.permute.xlu0 %806
      %808 = vrot.lane.b32.xlu0 %v473, 32
      %v809 = vpop.permute.xlu0 %808
      %810 = vrot.lane.b32.xlu0 %v475, 32
      %v811 = vpop.permute.xlu0 %810
      %812 = vrot.lane.b32.xlu0 %v477, 32
      %v813 = vpop.permute.xlu0 %812
      %814 = vrot.lane.b32.xlu0 %v479, 32
      %v815 = vpop.permute.xlu0 %814
      %816 = vrot.lane.b32.xlu0 %v481, 32
      %v817 = vpop.permute.xlu0 %816
      %818 = vrot.lane.b32.xlu0 %v483, 32
      %v819 = vpop.permute.xlu0 %818
      %820 = vrot.lane.b32.xlu0 %v485, 32
      %v821 = vpop.permute.xlu0 %820
      %822 = vrot.lane.b32.xlu0 %v487, 32
      %v823 = vpop.permute.xlu0 %822
      %824 = vrot.lane.b32.xlu0 %v489, 32
      %v825 = vpop.permute.xlu0 %824
      %826 = vrot.lane.b32.xlu0 %v491, 32
      %v827 = vpop.permute.xlu0 %826
      %828 = vrot.lane.b32.xlu0 %v493, 32
      %v829 = vpop.permute.xlu0 %828
      %830 = vrot.lane.b32.xlu0 %v495, 32
      %v831 = vpop.permute.xlu0 %830
      %832 = vrot.lane.b32.xlu0 %v497, 32
      %v833 = vpop.permute.xlu0 %832
      %834 = vrot.lane.b32.xlu0 %v499, 32
      %v835 = vpop.permute.xlu0 %834
      %836 = vrot.lane.b32.xlu0 %v501, 32
      %v837 = vpop.permute.xlu0 %836
      %v854 = vadd.f32 %v726, %v807
      %v855 = vadd.f32 %v727, %v809
      %v856 = vadd.f32 %v728, %v811
      %v857 = vadd.f32 %v729, %v813
      %v858 = vadd.f32 %v730, %v815
      %v859 = vadd.f32 %v731, %v817
      %v860 = vadd.f32 %v732, %v819
      %v861 = vadd.f32 %v733, %v821
      %v862 = vadd.f32 %v734, %v823
      %v863 = vadd.f32 %v735, %v825
      %v864 = vadd.f32 %v736, %v827
      %v865 = vadd.f32 %v737, %v829
      %v866 = vadd.f32 %v738, %v831
      %v867 = vadd.f32 %v739, %v833
      %v868 = vadd.f32 %v740, %v835
      %v869 = vadd.f32 %v741, %v837
      %870 = vrot.lane.b32.xlu0 %v502, 32
      %v871 = vpop.permute.xlu0 %870
      %872 = vrot.lane.b32.xlu0 %v503, 32
      %v873 = vpop.permute.xlu0 %872
      %874 = vrot.lane.b32.xlu0 %v504, 32
      %v875 = vpop.permute.xlu0 %874
      %876 = vrot.lane.b32.xlu0 %v505, 32
      %v877 = vpop.permute.xlu0 %876
      %878 = vrot.lane.b32.xlu0 %v506, 32
      %v879 = vpop.permute.xlu0 %878
      %880 = vrot.lane.b32.xlu0 %v507, 32
      %v881 = vpop.permute.xlu0 %880
      %882 = vrot.lane.b32.xlu0 %v508, 32
      %v883 = vpop.permute.xlu0 %882
      %884 = vrot.lane.b32.xlu0 %v509, 32
      %v885 = vpop.permute.xlu0 %884
      %886 = vrot.lane.b32.xlu0 %v510, 32
      %v887 = vpop.permute.xlu0 %886
      %888 = vrot.lane.b32.xlu0 %v511, 32
      %v889 = vpop.permute.xlu0 %888
      %890 = vrot.lane.b32.xlu0 %v512, 32
      %v891 = vpop.permute.xlu0 %890
      %892 = vrot.lane.b32.xlu0 %v513, 32
      %v893 = vpop.permute.xlu0 %892
      %894 = vrot.lane.b32.xlu0 %v514, 32
      %v895 = vpop.permute.xlu0 %894
      %896 = vrot.lane.b32.xlu0 %v515, 32
      %v897 = vpop.permute.xlu0 %896
      %898 = vrot.lane.b32.xlu0 %v516, 32
      %v899 = vpop.permute.xlu0 %898
      %900 = vrot.lane.b32.xlu0 %v517, 32
      %v901 = vpop.permute.xlu0 %900
      %v918 = vadd.f32 %v790, %v871
      %v919 = vadd.f32 %v791, %v873
      %v920 = vadd.f32 %v792, %v875
      %v921 = vadd.f32 %v793, %v877
      %v922 = vadd.f32 %v794, %v879
      %v923 = vadd.f32 %v795, %v881
      %v924 = vadd.f32 %v796, %v883
      %v925 = vadd.f32 %v797, %v885
      %v926 = vadd.f32 %v798, %v887
      %v927 = vadd.f32 %v799, %v889
      %v928 = vadd.f32 %v800, %v891
      %v929 = vadd.f32 %v801, %v893
      %v930 = vadd.f32 %v802, %v895
      %v931 = vadd.f32 %v803, %v897
      %v932 = vadd.f32 %v804, %v899
      %v933 = vadd.f32 %v805, %v901
      %v934 = vrcp.pop %v854
      %v935 = vmul.f32 %v918, %v934
      %v936 = vrcp.pop %v855
      %v937 = vmul.f32 %v919, %v936
      %v938 = vrcp.pop %v856
      %v939 = vmul.f32 %v920, %v938
      %v940 = vrcp.pop %v857
      %v941 = vmul.f32 %v921, %v940
      %v942 = vrcp.pop %v858
      %v943 = vmul.f32 %v922, %v942
      %v944 = vrcp.pop %v859
      %v945 = vmul.f32 %v923, %v944
      %v946 = vrcp.pop %v860
      %v947 = vmul.f32 %v924, %v946
      %v948 = vrcp.pop %v861
      %v949 = vmul.f32 %v925, %v948
      %v950 = vrcp.pop %v862
      %v951 = vmul.f32 %v926, %v950
      %v952 = vrcp.pop %v863
      %v953 = vmul.f32 %v927, %v952
      %v954 = vrcp.pop %v864
      %v955 = vmul.f32 %v928, %v954
      %v956 = vrcp.pop %v865
      %v957 = vmul.f32 %v929, %v956
      %v958 = vrcp.pop %v866
      %v959 = vmul.f32 %v930, %v958
      %v960 = vrcp.pop %v867
      %v961 = vmul.f32 %v931, %v960
      %v962 = vrcp.pop %v868
      %v963 = vmul.f32 %v932, %v962
      %v964 = vrcp.pop %v869
      %v965 = vmul.f32 %v933, %v964
      %vm966 = vcmask 261120
      %967 = vst.msk [vmem:[%s172] sm:$0xff] %vm966, %v935
      %968 = vst.msk [vmem:[%s172 + $0x8] sm:$0xff] %vm966, %v937
      %969 = vst.msk [vmem:[%s172 + $0x10] sm:$0xff] %vm966, %v939
      %970 = vst.msk [vmem:[%s172 + $0x18] sm:$0xff] %vm966, %v941
      %971 = vst.msk [vmem:[%s172 + $0x20] sm:$0xff] %vm966, %v943
      %972 = vst.msk [vmem:[%s172 + $0x28] sm:$0xff] %vm966, %v945
      %973 = vst.msk [vmem:[%s172 + $0x30] sm:$0xff] %vm966, %v947
      %974 = vst.msk [vmem:[%s172 + $0x38] sm:$0xff] %vm966, %v949
      %975 = vst.msk [vmem:[%s172 + $0x40] sm:$0xff] %vm966, %v951
      %976 = vst.msk [vmem:[%s172 + $0x48] sm:$0xff] %vm966, %v953
      %977 = vst.msk [vmem:[%s172 + $0x50] sm:$0xff] %vm966, %v955
      %978 = vst.msk [vmem:[%s172 + $0x58] sm:$0xff] %vm966, %v957
      %979 = vst.msk [vmem:[%s172 + $0x60] sm:$0xff] %vm966, %v959
      %980 = vst.msk [vmem:[%s172 + $0x68] sm:$0xff] %vm966, %v961
      %981 = vst.msk [vmem:[%s172 + $0x70] sm:$0xff] %vm966, %v963
      %982 = vst.msk [vmem:[%s172 + $0x78] sm:$0xff] %vm966, %v965
      %s983 = smul.u32 16, %s14
      %p984 = scmp.lt.s32.totalorder %s983, 31
      %s985 = scalar_select %p984, %s983, 31
      %s986 = smul.addr %s985, 8
      %s987 = scalar_lea.vmem %s3, %s986
      // Predicated region
      $region33: #{_forward.1} parent=31 // pred_check
        %p988 = pneg %p100
      $region34: #{_forward.1} parent=31 // pred_check_branch
        %990 = sbr.rel (%p988) target = $region36
      $region35: #{_forward.1} parent=31 // pred_region
        %s991 = smul.u32 16, %s14
      $region36: #{_forward.1} parent=31 // pred_fallthru
        _
    $region32: #{_forward.1} parent=5 // pred_fallthru
      _
    %p992 = scmp.le.s32.totalorder 2, %s9
    // Predicated region
    $region37: #{_forward.1} parent=5 // pred_check
      %p993 = pneg %p992
    $region38: #{_forward.1} parent=5 // pred_check_branch
      %995 = sbr.rel (%p993) target = $region40
    $region39: #{_forward.1} parent=5 // pred_region
      %s996 = ssub.s32 %s9, 2
      // Predicated region
      $region41: #{_forward.1} parent=39 // pred_check
        %p997 = pneg %p106
      $region42: #{_forward.1} parent=39 // pred_check_branch
        %999 = sbr.rel (%p997) target = $region44
      $region43: #{_forward.1} parent=39 // pred_region
        %s1000 = smul.u32 16, %s15
        %p1001 = scmp.lt.s32.totalorder %s1000, 31
        %s1002 = scalar_select %p1001, %s1000, 31
        %s1003 = smul.addr %s1002, 8
        %s1004 = scalar_lea.vmem %s3, %s1003
      $region44: #{_forward.1} parent=39 // pred_fallthru
        _
    $region40: #{_forward.1} parent=5 // pred_fallthru
      _
  $region6: #{_forward.1} parent=0 // loop_footer
    %s13 = sadd.s32 1, %s9
  $region7: #{_forward.1} parent=0 // loop_footer_branch
    %8 = sbr.rel target = $region3
  $region8: #{_forward.1} parent=0 // loop_exit
    _

</llo_original>
